<compile_context>
chip_gen: v7x
topology: tpu7x:2x2x1
jax: 0.10.0
libtpu: 0.0.40
codegen_flags: <defaults>
</compile_context>

<pallas_src>
import functools

import jax
import jax.numpy as jnp
from jax.experimental import pallas as pl
from jax.experimental.pallas import tpu as pltpu

L1 = 256
L2 = 128
LANES = 128
TB_MAX = 1024          # batch tile (rows); must be a multiple of 128


def _round_up(n, m):
    return ((n + m - 1) // m) * m


def _elementwise_dtype():
    """bf16 elementwise on chips with a bf16 VPU (v6e/v7x), f32 otherwise."""
    try:
        kind = jax.devices()[0].device_kind.lower()
    except Exception:
        return jnp.float32
    for tag in ("v2", "v3", "v4", "v5"):
        if tag in kind:
            return jnp.float32
    return jnp.bfloat16


def _critic_kernel(x_ref, u_ref, w1_ref, b1_ref, w2_ref, b2_ref,
                   w3_ref, b3_ref, out_ref, *, ew_dtype):
    # Fused torch.cat([x, u], 1): in-kernel lane concat, then ONE K=d_in matmul.
    xu = jnp.concatenate([x_ref[...], u_ref[...]], axis=-1)        # (TB, d_in)
    h1 = jnp.dot(xu.astype(jnp.bfloat16), w1_ref[...],
                 preferred_element_type=jnp.float32)               # (TB, 256) f32
    h1 = jnp.maximum(h1.astype(ew_dtype) + b1_ref[...].astype(ew_dtype), 0.0)

    # Layer 2: (TB, 256) @ (256, 128) + b2, ReLU
    h2 = jnp.dot(h1.astype(jnp.bfloat16), w2_ref[...],
                 preferred_element_type=jnp.float32)               # (TB, 128) f32
    h2 = jnp.maximum(h2.astype(ew_dtype) + b2_ref[...].astype(ew_dtype), 0.0)

    # Layer 3: N=1 projection as VPU multiply + lane reduction (no MXU pass).
    # Emit lane-dense: (TB//128, 128) so the store is a full-width vst.
    g, lanes = out_ref.shape[1], out_ref.shape[2]
    h2r = h2.reshape(g, lanes, h2.shape[-1]).astype(jnp.float32)   # layout no-op
    w3_row = w3_ref[...].astype(jnp.float32)                       # (1, 128)
    q = jnp.sum(h2r * w3_row, axis=-1)                             # (g, 128) f32
    q = q + b3_ref[...].astype(jnp.float32)                        # broadcast (1,1)
    out_ref[...] = q[jnp.newaxis].astype(out_ref.dtype)            # (1, g, 128)


@jax.jit
def critic_forward(x, u, params):
    """x: (B, state_dim), u: (B, action_dim) -> (B, 1) f32."""
    w1, b1, w2, b2, w3, b3 = params
    B, sd = x.shape
    ad = u.shape[1]
    d_in = sd + ad

    # Tile selection: multiples of 128 rows (lane-dense output); at least two
    # tiles whenever B > 128 so v7x can use both TensorCores.
    if B <= LANES:
        tb = LANES
    else:
        tb = min(TB_MAX, _round_up((B + 1) // 2, LANES))
    bp = _round_up(B, tb)
    grid_n = bp // tb
    if bp != B:
        pad = bp - B
        x = jnp.pad(x, ((0, pad), (0, 0)))
        u = jnp.pad(u, ((0, pad), (0, 0)))

    ew_dtype = _elementwise_dtype()

    # Activations stream per-tile; parameters stay resident (constant index_map).
    act_x_spec = pl.BlockSpec((tb, sd), lambda i: (i, 0))
    act_u_spec = pl.BlockSpec((tb, ad), lambda i: (i, 0))
    resident = lambda shape: pl.BlockSpec(shape, lambda i: (0, 0))
    out_spec = pl.BlockSpec((1, tb // LANES, LANES), lambda i: (i, 0, 0))

    weight_bytes = 2 * (d_in * L1 + L1 * L2 + L2) + 4 * (L1 + L2 + 1)
    cost = pl.CostEstimate(
        flops=2 * bp * (d_in * L1 + L1 * L2 + L2),
        transcendentals=0,
        bytes_accessed=bp * (d_in * x.dtype.itemsize + 4) + weight_bytes,
    )

    # TODO(synk): for large-B serving with a feature-major producer, a
    # transposed batch-on-lanes formulation (and bf16 x/u) would further cut
    # lane padding / HBM traffic; not applicable with this caller contract.
    out = pl.pallas_call(
        functools.partial(_critic_kernel, ew_dtype=ew_dtype),
        out_shape=jax.ShapeDtypeStruct((grid_n, tb // LANES, LANES),
                                       jnp.float32),
        grid=(grid_n,),
        in_specs=[
            act_x_spec,                       # x tile
            act_u_spec,                       # u tile
            resident((d_in, L1)),             # w1 (bf16, fused concat weight)
            resident((1, L1)),                # b1 (f32)
            resident((L1, L2)),               # w2 (bf16)
            resident((1, L2)),                # b2 (f32)
            resident((1, L2)),                # w3 row (bf16)
            resident((1, 1)),                 # b3 (f32)
        ],
        out_specs=out_spec,
        compiler_params=pltpu.CompilerParams(
            dimension_semantics=("parallel",)),
        cost_estimate=cost,
    )(x, u, w1, b1, w2, b2, w3, b3)

    return out.reshape(bp, 1)[:B]


def init_critic_params(key, state_dim, action_dim):
    """Mimics nn.Linear init U(-1/sqrt(fan_in), 1/sqrt(fan_in)).

    Weights stored transposed (in_features, out_features), bf16 for the MXU.
    w1 covers the concatenated [state, action] input (single K=d_in matmul).
    w3 is stored as a (1, L2) row for the VPU lane-reduce.  Biases are f32.
    """
    d_in = state_dim + action_dim
    key, k1w, k1b, k2w, k2b, k3w, k3b = jax.random.split(key, 7)

    def uni(k, shape, fan_in):
        bound = 1.0 / jnp.sqrt(jnp.float32(fan_in))
        return jax.random.uniform(k, shape, jnp.float32, -bound, bound)

    w1 = uni(k1w, (d_in, L1), d_in)
    b1 = uni(k1b, (1, L1), d_in)
    w2 = uni(k2w, (L1, L2), L1)
    b2 = uni(k2b, (1, L2), L1)
    w3 = uni(k3w, (1, L2), L2)          # row form of (L2, 1)
    b3 = uni(k3b, (1, 1), L2)

    return (w1.astype(jnp.bfloat16), b1, w2.astype(jnp.bfloat16), b2,
            w3.astype(jnp.bfloat16), b3)


def critic_reference(x, u, params):
    """Plain-JAX reference (f32 math on the same bf16-stored weights)."""
    w1, b1, w2, b2, w3, b3 = params
    h = jnp.concatenate([x, u], axis=1)
    h = jnp.maximum(h @ w1.astype(jnp.float32) + b1, 0.0)
    h = jnp.maximum(h @ w2.astype(jnp.float32) + b2, 0.0)
    return h @ w3.astype(jnp.float32).T + b3


if __name__ == "__main__":
    # Small, deterministic example shapes consistent with the module's forward.
    batch = 8
    state_dim = 12
    action_dim = 4

    key = jax.random.PRNGKey(0)
    k_params, k_x, k_u = jax.random.split(key, 3)

    params = init_critic_params(k_params, state_dim, action_dim)
    x = jax.random.normal(k_x, (batch, state_dim), jnp.float32)
    u = jax.random.normal(k_u, (batch, action_dim), jnp.float32)

    out = critic_forward(x, u, params)
    out = jax.block_until_ready(out)

    ref = critic_reference(x, u, params)
    assert out.shape == (batch, 1), out.shape
    # bf16 matmul operands (and bf16 elementwise on v6e/v7x) with f32
    # accumulation -> loosened tolerance vs. the f32 reference.
    assert jnp.allclose(out, ref, atol=5e-2, rtol=5e-2), (
        f"max abs err {jnp.max(jnp.abs(out - ref))}")

    print("KERNEL_OK")
</pallas_src>

<mosaic_0001>
module attributes {stable_mosaic.version = 11 : i64} {
  func.func @_critic_kernel(%arg0: i32, %arg1: memref<128x12xf32, #tpu.memory_space<vmem>>, %arg2: memref<128x4xf32, #tpu.memory_space<vmem>>, %arg3: memref<16x256xbf16, #tpu.memory_space<vmem>>, %arg4: memref<1x256xf32, #tpu.memory_space<vmem>>, %arg5: memref<256x128xbf16, #tpu.memory_space<vmem>>, %arg6: memref<1x128xf32, #tpu.memory_space<vmem>>, %arg7: memref<1x128xbf16, #tpu.memory_space<vmem>>, %arg8: memref<1x1xf32, #tpu.memory_space<vmem>>, %arg9: memref<1x1x128xf32, #tpu.memory_space<vmem>>) attributes {dimension_semantics = [#tpu.dimension_semantics<parallel>], iteration_bounds = array<i64: 1>, scalar_prefetch = 0 : i64, scratch_operands = 0 : i64, tpu.core_type = #tpu.core_type<tc>, window_params = [{transform_indices = @transform_0, window_bounds = array<i64: 128, 12>}, {transform_indices = @transform_1, window_bounds = array<i64: 128, 4>}, {pipeline_mode = #tpu.pipeline_mode<synchronous>, transform_indices = @transform_2, window_bounds = array<i64: 16, 256>}, {pipeline_mode = #tpu.pipeline_mode<synchronous>, transform_indices = @transform_3, window_bounds = array<i64: 1, 256>}, {pipeline_mode = #tpu.pipeline_mode<synchronous>, transform_indices = @transform_4, window_bounds = array<i64: 256, 128>}, {pipeline_mode = #tpu.pipeline_mode<synchronous>, transform_indices = @transform_5, window_bounds = array<i64: 1, 128>}, {pipeline_mode = #tpu.pipeline_mode<synchronous>, transform_indices = @transform_6, window_bounds = array<i64: 1, 128>}, {pipeline_mode = #tpu.pipeline_mode<synchronous>, transform_indices = @transform_7, window_bounds = array<i64: 1, 1>}, {transform_indices = @transform_8, window_bounds = array<i64: 1, 1, 128>}]} {
    %c0 = arith.constant 0 : index
    %c0_0 = arith.constant 0 : index
    %0 = vector.load %arg1[%c0, %c0_0] : memref<128x12xf32, #tpu.memory_space<vmem>>, vector<128x12xf32>
    %c0_1 = arith.constant 0 : index
    %c0_2 = arith.constant 0 : index
    %1 = vector.load %arg2[%c0_1, %c0_2] : memref<128x4xf32, #tpu.memory_space<vmem>>, vector<128x4xf32>
    %2 = tpu.concatenate %0, %1 in 1 : vector<128x12xf32>, vector<128x4xf32> -> vector<128x16xf32>
    %3 = arith.truncf %2 : vector<128x16xf32> to vector<128x16xbf16>
    %c0_3 = arith.constant 0 : index
    %c0_4 = arith.constant 0 : index
    %4 = vector.load %arg3[%c0_3, %c0_4] : memref<16x256xbf16, #tpu.memory_space<vmem>>, vector<16x256xbf16>
    %cst = arith.constant dense<0.000000e+00> : vector<128x256xf32>
    %5 = tpu.matmul %3, %4, %cst {dimension_numbers = #tpu.dot_dimension_numbers<[1], [0], [0], [1], [0, 0, 1, 1], [], []>} : vector<128x16xbf16>, vector<16x256xbf16>, vector<128x256xf32> -> vector<128x256xf32>
    %6 = arith.truncf %5 : vector<128x256xf32> to vector<128x256xbf16>
    %c0_5 = arith.constant 0 : index
    %c0_6 = arith.constant 0 : index
    %7 = vector.load %arg4[%c0_5, %c0_6] : memref<1x256xf32, #tpu.memory_space<vmem>>, vector<1x256xf32>
    %8 = arith.truncf %7 : vector<1x256xf32> to vector<1x256xbf16>
    %9 = vector.broadcast %8 : vector<1x256xbf16> to vector<128x256xbf16>
    %10 = arith.addf %6, %9 : vector<128x256xbf16>
    %cst_7 = arith.constant 0.000000e+00 : bf16
    %11 = vector.broadcast %cst_7 : bf16 to vector<128x256xbf16>
    %12 = arith.maximumf %10, %11 : vector<128x256xbf16>
    %c0_8 = arith.constant 0 : index
    %c0_9 = arith.constant 0 : index
    %13 = vector.load %arg5[%c0_8, %c0_9] : memref<256x128xbf16, #tpu.memory_space<vmem>>, vector<256x128xbf16>
    %cst_10 = arith.constant dense<0.000000e+00> : vector<128x128xf32>
    %14 = tpu.matmul %12, %13, %cst_10 {dimension_numbers = #tpu.dot_dimension_numbers<[1], [0], [0], [1], [0, 0, 1, 1], [], []>} : vector<128x256xbf16>, vector<256x128xbf16>, vector<128x128xf32> -> vector<128x128xf32>
    %15 = arith.truncf %14 : vector<128x128xf32> to vector<128x128xbf16>
    %c0_11 = arith.constant 0 : index
    %c0_12 = arith.constant 0 : index
    %16 = vector.load %arg6[%c0_11, %c0_12] : memref<1x128xf32, #tpu.memory_space<vmem>>, vector<1x128xf32>
    %17 = arith.truncf %16 : vector<1x128xf32> to vector<1x128xbf16>
    %18 = vector.broadcast %17 : vector<1x128xbf16> to vector<128x128xbf16>
    %19 = arith.addf %15, %18 : vector<128x128xbf16>
    %cst_13 = arith.constant 0.000000e+00 : bf16
    %20 = vector.broadcast %cst_13 : bf16 to vector<128x128xbf16>
    %21 = arith.maximumf %19, %20 : vector<128x128xbf16>
    %22 = vector.shape_cast %21 : vector<128x128xbf16> to vector<1x128x128xbf16>
    %23 = arith.extf %22 : vector<1x128x128xbf16> to vector<1x128x128xf32>
    %c0_14 = arith.constant 0 : index
    %c0_15 = arith.constant 0 : index
    %24 = vector.load %arg7[%c0_14, %c0_15] : memref<1x128xbf16, #tpu.memory_space<vmem>>, vector<1x128xbf16>
    %25 = arith.extf %24 : vector<1x128xbf16> to vector<1x128xf32>
    %26 = vector.shape_cast %25 : vector<1x128xf32> to vector<1x1x128xf32>
    %27 = vector.broadcast %26 : vector<1x1x128xf32> to vector<1x128x128xf32>
    %28 = arith.mulf %23, %27 : vector<1x128x128xf32>
    %cst_16 = arith.constant dense<0.000000e+00> : vector<1x128xf32>
    %29 = vector.multi_reduction <add>, %28, %cst_16 [2] : vector<1x128x128xf32> to vector<1x128xf32>
    %c0_17 = arith.constant 0 : index
    %c0_18 = arith.constant 0 : index
    %30 = vector.load %arg8[%c0_17, %c0_18] : memref<1x1xf32, #tpu.memory_space<vmem>>, vector<1x1xf32>
    %31 = vector.broadcast %30 : vector<1x1xf32> to vector<1x128xf32>
    %32 = arith.addf %29, %31 : vector<1x128xf32>
    %33 = vector.shape_cast %32 : vector<1x128xf32> to vector<1x1x128xf32>
    %c0_19 = arith.constant 0 : index
    %c0_20 = arith.constant 0 : index
    %c0_21 = arith.constant 0 : index
    %34 = vector.load %arg9[%c0_19, %c0_20, %c0_21] : memref<1x1x128xf32, #tpu.memory_space<vmem>>, vector<1x1x128xf32>
    tpu.vector_store %arg9[%c0_19, %c0_20, %c0_21], %33 {strides = array<i32>} : memref<1x1x128xf32, #tpu.memory_space<vmem>>, vector<1x1x128xf32>,
    return
  }
  func.func @transform_0(%arg0: i32) -> (i32, i32) {
    %c0_i32 = arith.constant 0 : i32
    %c0_i32_0 = arith.constant 0 : i32
    return %arg0, %c0_i32 : i32, i32
  }
  func.func @transform_1(%arg0: i32) -> (i32, i32) {
    %c0_i32 = arith.constant 0 : i32
    %c0_i32_0 = arith.constant 0 : i32
    return %arg0, %c0_i32 : i32, i32
  }
  func.func @transform_2(%arg0: i32) -> (i32, i32) {
    %c0_i32 = arith.constant 0 : i32
    %c0_i32_0 = arith.constant 0 : i32
    %c0_i32_1 = arith.constant 0 : i32
    return %c0_i32, %c0_i32_0 : i32, i32
  }
  func.func @transform_3(%arg0: i32) -> (i32, i32) {
    %c0_i32 = arith.constant 0 : i32
    %c0_i32_0 = arith.constant 0 : i32
    %c0_i32_1 = arith.constant 0 : i32
    return %c0_i32, %c0_i32_0 : i32, i32
  }
  func.func @transform_4(%arg0: i32) -> (i32, i32) {
    %c0_i32 = arith.constant 0 : i32
    %c0_i32_0 = arith.constant 0 : i32
    %c0_i32_1 = arith.constant 0 : i32
    return %c0_i32, %c0_i32_0 : i32, i32
  }
  func.func @transform_5(%arg0: i32) -> (i32, i32) {
    %c0_i32 = arith.constant 0 : i32
    %c0_i32_0 = arith.constant 0 : i32
    %c0_i32_1 = arith.constant 0 : i32
    return %c0_i32, %c0_i32_0 : i32, i32
  }
  func.func @transform_6(%arg0: i32) -> (i32, i32) {
    %c0_i32 = arith.constant 0 : i32
    %c0_i32_0 = arith.constant 0 : i32
    %c0_i32_1 = arith.constant 0 : i32
    return %c0_i32, %c0_i32_0 : i32, i32
  }
  func.func @transform_7(%arg0: i32) -> (i32, i32) {
    %c0_i32 = arith.constant 0 : i32
    %c0_i32_0 = arith.constant 0 : i32
    %c0_i32_1 = arith.constant 0 : i32
    return %c0_i32, %c0_i32_0 : i32, i32
  }
  func.func @transform_8(%arg0: i32) -> (i32, i32, i32) {
    %c0_i32 = arith.constant 0 : i32
    %c0_i32_0 = arith.constant 0 : i32
    %c0_i32_1 = arith.constant 0 : i32
    return %arg0, %c0_i32, %c0_i32_0 : i32, i32, i32
  }
}

</mosaic_0001>

<llo_original>
// kernel: critic_forward.1
$region0: #{critic_forward.1}
  #allocation0 [shape = 'u32[]', space=smem, size = 0x4, offset = 0x4, fixed_abs, tag = 'smem constant byte address 0x4 - core index']
  #allocation1 [shape = 'u32[144,128]{1,0:T(1,128)}', space=vmem, size = 0x12000, scoped, tag = 'internal scratch']
  #allocation2 [shape = 'f32[1,1]{1,0:T(1,128)S(1)}', space=vmem, size = 0x200, scoped, tag = 'scoped memory for critic_forward.1']
  %s0 = inlined_call_operand.vmem [shape: f32[128,12], index: 0, kind: input, shape index: {}]
  %s1 = inlined_call_operand.vmem [shape: f32[128,4], index: 1, kind: input, shape index: {}]
  %s2 = inlined_call_operand.vmem [shape: bf16[16,256], index: 2, kind: input, shape index: {}]
  %s3 = inlined_call_operand.vmem [shape: f32[1,256], index: 3, kind: input, shape index: {}]
  %s4 = inlined_call_operand.vmem [shape: bf16[256,128], index: 4, kind: input, shape index: {}]
  %s5 = inlined_call_operand.vmem [shape: f32[1,128], index: 5, kind: input, shape index: {}]
  %s6 = inlined_call_operand.vmem [shape: bf16[1,128], index: 6, kind: input, shape index: {}]
  %s7 = inlined_call_operand.<no memory space> [shape: f32[1,1], index: 7, kind: input, shape index: {}]
  %s8 = inlined_call_operand.vmem [shape: f32[1,1,128], index: 8, kind: output, shape index: {}]
  %s9 = sld [smem:[#allocation0]]
  $region42: #{critic_forward.1} parent=0
    _
  %s11 = ssub.s32 1, %s9
  %s12 = scalar_select 0, %s11, %s9
  %v13 = vstv %s7
  %14 = vst [vmem:[#allocation2] sm:$0x1] %v13
  // Predicated region
  $region2: #{critic_forward.1} parent=0 // pred_check
    _
  $region3: #{critic_forward.1} parent=0 // pred_check_branch
    %16 = sbr.rel (0) target = $region5
  $region4: #{critic_forward.1} parent=0 // pred_region
    _
  $region5: #{critic_forward.1} parent=0 // pred_fallthru
    _
  // Predicated region
  $region6: #{critic_forward.1} parent=0 // pred_check
    _
  $region7: #{critic_forward.1} parent=0 // pred_check_branch
    %18 = sbr.rel (0) target = $region9
  $region8: #{critic_forward.1} parent=0 // pred_region
    _
  $region9: #{critic_forward.1} parent=0 // pred_fallthru
    _
  // Predicated region
  $region10: #{critic_forward.1} parent=0 // pred_check
    _
  $region11: #{critic_forward.1} parent=0 // pred_check_branch
    %20 = sbr.rel (0) target = $region13
  $region12: #{critic_forward.1} parent=0 // pred_region
    _
  $region13: #{critic_forward.1} parent=0 // pred_fallthru
    _
  // Predicated region
  $region14: #{critic_forward.1} parent=0 // pred_check
    _
  $region15: #{critic_forward.1} parent=0 // pred_check_branch
    %22 = sbr.rel (0) target = $region17
  $region16: #{critic_forward.1} parent=0 // pred_region
    _
  $region17: #{critic_forward.1} parent=0 // pred_fallthru
    _
  // Predicated region
  $region18: #{critic_forward.1} parent=0 // pred_check
    _
  $region19: #{critic_forward.1} parent=0 // pred_check_branch
    %24 = sbr.rel (0) target = $region21
  $region20: #{critic_forward.1} parent=0 // pred_region
    _
  $region21: #{critic_forward.1} parent=0 // pred_fallthru
    _
  // Predicated region
  $region22: #{critic_forward.1} parent=0 // pred_check
    _
  $region23: #{critic_forward.1} parent=0 // pred_check_branch
    %26 = sbr.rel (0) target = $region25
  $region24: #{critic_forward.1} parent=0 // pred_region
    _
  $region25: #{critic_forward.1} parent=0 // pred_fallthru
    _
  // Predicated region
  $region26: #{critic_forward.1} parent=0 // pred_check
    _
  $region27: #{critic_forward.1} parent=0 // pred_check_branch
    %28 = sbr.rel (0) target = $region29
  $region28: #{critic_forward.1} parent=0 // pred_region
    _
  $region29: #{critic_forward.1} parent=0 // pred_fallthru
    _
  // Predicated region
  $region30: #{critic_forward.1} parent=0 // pred_check
    _
  $region31: #{critic_forward.1} parent=0 // pred_check_branch
    %30 = sbr.rel (0) target = $region33
  $region32: #{critic_forward.1} parent=0 // pred_region
    _
  $region33: #{critic_forward.1} parent=0 // pred_fallthru
    _
  %v32 = vld [vmem:[%s0] sm:$0xff]
  %v33 = vld [vmem:[%s0 + $0x8] sm:$0xff]
  %v34 = vld [vmem:[%s0 + $0x10] sm:$0xff]
  %v35 = vld [vmem:[%s0 + $0x18] sm:$0xff]
  %v36 = vld [vmem:[%s0 + $0x20] sm:$0xff]
  %v37 = vld [vmem:[%s0 + $0x28] sm:$0xff]
  %v38 = vld [vmem:[%s0 + $0x30] sm:$0xff]
  %v39 = vld [vmem:[%s0 + $0x38] sm:$0xff]
  %v40 = vld [vmem:[%s0 + $0x40] sm:$0xff]
  %v41 = vld [vmem:[%s0 + $0x48] sm:$0xff]
  %v42 = vld [vmem:[%s0 + $0x50] sm:$0xff]
  %v43 = vld [vmem:[%s0 + $0x58] sm:$0xff]
  %v44 = vld [vmem:[%s0 + $0x60] sm:$0xff]
  %v45 = vld [vmem:[%s0 + $0x68] sm:$0xff]
  %v46 = vld [vmem:[%s0 + $0x70] sm:$0xff]
  %v47 = vld [vmem:[%s0 + $0x78] sm:$0xff]
  %v48 = vld [vmem:[%s1] sm:$0xff]
  %v49 = vld [vmem:[%s1 + $0x8] sm:$0xff]
  %v50 = vld [vmem:[%s1 + $0x10] sm:$0xff]
  %v51 = vld [vmem:[%s1 + $0x18] sm:$0xff]
  %v52 = vld [vmem:[%s1 + $0x20] sm:$0xff]
  %v53 = vld [vmem:[%s1 + $0x28] sm:$0xff]
  %v54 = vld [vmem:[%s1 + $0x30] sm:$0xff]
  %v55 = vld [vmem:[%s1 + $0x38] sm:$0xff]
  %v56 = vld [vmem:[%s1 + $0x40] sm:$0xff]
  %v57 = vld [vmem:[%s1 + $0x48] sm:$0xff]
  %v58 = vld [vmem:[%s1 + $0x50] sm:$0xff]
  %v59 = vld [vmem:[%s1 + $0x58] sm:$0xff]
  %v60 = vld [vmem:[%s1 + $0x60] sm:$0xff]
  %v61 = vld [vmem:[%s1 + $0x68] sm:$0xff]
  %v62 = vld [vmem:[%s1 + $0x70] sm:$0xff]
  %v63 = vld [vmem:[%s1 + $0x78] sm:$0xff]
  %80 = vrot.lane.b32.xlu0 %v48, 12
  %v81 = vpop.permute.xlu0 %80
  %82 = vrot.lane.b32.xlu0 %v49, 12
  %v83 = vpop.permute.xlu0 %82
  %84 = vrot.lane.b32.xlu0 %v50, 12
  %v85 = vpop.permute.xlu0 %84
  %86 = vrot.lane.b32.xlu0 %v51, 12
  %v87 = vpop.permute.xlu0 %86
  %88 = vrot.lane.b32.xlu0 %v52, 12
  %v89 = vpop.permute.xlu0 %88
  %90 = vrot.lane.b32.xlu0 %v53, 12
  %v91 = vpop.permute.xlu0 %90
  %92 = vrot.lane.b32.xlu0 %v54, 12
  %v93 = vpop.permute.xlu0 %92
  %94 = vrot.lane.b32.xlu0 %v55, 12
  %v95 = vpop.permute.xlu0 %94
  %96 = vrot.lane.b32.xlu0 %v56, 12
  %v97 = vpop.permute.xlu0 %96
  %98 = vrot.lane.b32.xlu0 %v57, 12
  %v99 = vpop.permute.xlu0 %98
  %100 = vrot.lane.b32.xlu0 %v58, 12
  %v101 = vpop.permute.xlu0 %100
  %102 = vrot.lane.b32.xlu0 %v59, 12
  %v103 = vpop.permute.xlu0 %102
  %104 = vrot.lane.b32.xlu0 %v60, 12
  %v105 = vpop.permute.xlu0 %104
  %106 = vrot.lane.b32.xlu0 %v61, 12
  %v107 = vpop.permute.xlu0 %106
  %108 = vrot.lane.b32.xlu0 %v62, 12
  %v109 = vpop.permute.xlu0 %108
  %110 = vrot.lane.b32.xlu0 %v63, 12
  %v111 = vpop.permute.xlu0 %110
  %vm128 = vcmask 97280
  %v129 = vsel %vm128, %v32, %v81
  %v130 = vsel %vm128, %v33, %v83
  %v131 = vsel %vm128, %v34, %v85
  %v132 = vsel %vm128, %v35, %v87
  %v133 = vsel %vm128, %v36, %v89
  %v134 = vsel %vm128, %v37, %v91
  %v135 = vsel %vm128, %v38, %v93
  %v136 = vsel %vm128, %v39, %v95
  %v137 = vsel %vm128, %v40, %v97
  %v138 = vsel %vm128, %v41, %v99
  %v139 = vsel %vm128, %v42, %v101
  %v140 = vsel %vm128, %v43, %v103
  %v141 = vsel %vm128, %v44, %v105
  %v142 = vsel %vm128, %v45, %v107
  %v143 = vsel %vm128, %v46, %v109
  %v144 = vsel %vm128, %v47, %v111
  %v145 = vpack.c.bf16 %v130, %v129
  %v146 = vpack.c.bf16 %v132, %v131
  %v147 = vpack.c.bf16 %v134, %v133
  %v148 = vpack.c.bf16 %v136, %v135
  %v149 = vpack.c.bf16 %v138, %v137
  %v150 = vpack.c.bf16 %v140, %v139
  %v151 = vpack.c.bf16 %v142, %v141
  %v152 = vpack.c.bf16 %v144, %v143
  %v153 = vld [vmem:[%s2] sm:$0xff]
  %v154 = vld [vmem:[%s2 + $0x8] sm:$0xff]
  %v157 = vunpack.c.l.b16 %v153
  %v158 = vunpack.c.h.b16 %v153
  %v159 = vunpack.c.l.b16 %v154
  %v160 = vunpack.c.h.b16 %v154
  %v161 = vpack.c.b16 %v159, %v157
  %v162 = vpack.c.b16 %v160, %v158
  %vm165 = vcmask 130048
  %v167 = vsel %vm165, %v145, 0
  %v170 = vsel %vm165, %v146, 0
  %v173 = vsel %vm165, %v147, 0
  %v176 = vsel %vm165, %v148, 0
  %v179 = vsel %vm165, %v149, 0
  %v182 = vsel %vm165, %v150, 0
  %v185 = vsel %vm165, %v151, 0
  %v188 = vsel %vm165, %v152, 0
  %190 = vmatprep.subr.bf16.mxu0 %v162
  %191 = vmatpush1.bf16.msra.mxu0 %v161
  %192 = vmatprep.subr.bf16.mxu0 0
  %193 = vmatpush1.bf16.msra.mxu0 0
  %194 = vmatprep.subr.bf16.mxu0 0
  %195 = vmatpush1.bf16.msra.mxu0 0
  %196 = vmatprep.subr.bf16.mxu0 0
  %197 = vmatpush1.bf16.msra.mxu0 0
  %198 = vmatprep.subr.bf16.mxu0 0
  %199 = vmatpush1.bf16.msra.mxu0 0
  %200 = vmatprep.subr.bf16.mxu0 0
  %201 = vmatpush1.bf16.msra.mxu0 0
  %202 = vmatprep.subr.bf16.mxu0 0
  %203 = vmatpush1.bf16.msra.mxu0 0
  %204 = vmatprep.subr.bf16.mxu0 0
  %205 = vmatpush1.bf16.msra.mxu0 0
  %206 = vmatprep.subr.bf16.mxu0 0
  %207 = vmatpush1.bf16.msra.mxu0 0
  %208 = vmatprep.subr.bf16.mxu0 0
  %209 = vmatpush1.bf16.msra.mxu0 0
  %210 = vmatprep.subr.bf16.mxu0 0
  %211 = vmatpush1.bf16.msra.mxu0 0
  %212 = vmatprep.subr.bf16.mxu0 0
  %213 = vmatpush1.bf16.msra.mxu0 0
  %214 = vmatprep.subr.bf16.mxu0 0
  %215 = vmatpush1.bf16.msra.mxu0 0
  %216 = vmatprep.subr.bf16.mxu0 0
  %217 = vmatpush1.bf16.msra.mxu0 0
  %218 = vmatprep.subr.bf16.mxu0 0
  %219 = vmatpush1.bf16.msra.mxu0 0
  %220 = vmatprep.subr.bf16.mxu0 0
  %221 = vmatpush1.bf16.msra.mxu0 0
  %222 = vmatprep.mubr.bf16.mxu0 0
  %223 = vmatmul.mubr.bf16.gmra.mrb[0].mxu0 %v167
  %v224 = vpop.f32.mrb[0].mxu0
  %v225 = vadd.f32 0.0, %v224
  %v226 = vpop.f32.mrb[0].mxu0
  %v227 = vadd.f32 0.0, %v226
  %v228 = vpop.f32.mrb[0].mxu0
  %v229 = vadd.f32 0.0, %v228
  %v230 = vpop.f32.mrb[0].mxu0
  %v231 = vadd.f32 0.0, %v230
  %232 = vmatprep.mubr.bf16.mxu0 0
  %233 = vmatmul.mubr.bf16.gmra.mrb[0].mxu0 %v170
  %v234 = vpop.f32.mrb[0].mxu0
  %v235 = vadd.f32 0.0, %v234
  %v236 = vpop.f32.mrb[0].mxu0
  %v237 = vadd.f32 0.0, %v236
  %v238 = vpop.f32.mrb[0].mxu0
  %v239 = vadd.f32 0.0, %v238
  %v240 = vpop.f32.mrb[0].mxu0
  %v241 = vadd.f32 0.0, %v240
  %242 = vmatprep.mubr.bf16.mxu0 0
  %243 = vmatmul.mubr.bf16.gmra.mrb[0].mxu0 %v173
  %v244 = vpop.f32.mrb[0].mxu0
  %v245 = vadd.f32 0.0, %v244
  %v246 = vpop.f32.mrb[0].mxu0
  %v247 = vadd.f32 0.0, %v246
  %v248 = vpop.f32.mrb[0].mxu0
  %v249 = vadd.f32 0.0, %v248
  %v250 = vpop.f32.mrb[0].mxu0
  %v251 = vadd.f32 0.0, %v250
  %252 = vmatprep.mubr.bf16.mxu0 0
  %253 = vmatmul.mubr.bf16.gmra.mrb[0].mxu0 %v176
  %v254 = vpop.f32.mrb[0].mxu0
  %v255 = vadd.f32 0.0, %v254
  %v256 = vpop.f32.mrb[0].mxu0
  %v257 = vadd.f32 0.0, %v256
  %v258 = vpop.f32.mrb[0].mxu0
  %v259 = vadd.f32 0.0, %v258
  %v260 = vpop.f32.mrb[0].mxu0
  %v261 = vadd.f32 0.0, %v260
  %262 = vmatprep.mubr.bf16.mxu0 0
  %263 = vmatmul.mubr.bf16.gmra.mrb[0].mxu0 %v179
  %v264 = vpop.f32.mrb[0].mxu0
  %v265 = vadd.f32 0.0, %v264
  %v266 = vpop.f32.mrb[0].mxu0
  %v267 = vadd.f32 0.0, %v266
  %v268 = vpop.f32.mrb[0].mxu0
  %v269 = vadd.f32 0.0, %v268
  %v270 = vpop.f32.mrb[0].mxu0
  %v271 = vadd.f32 0.0, %v270
  %272 = vmatprep.mubr.bf16.mxu0 0
  %273 = vmatmul.mubr.bf16.gmra.mrb[0].mxu0 %v182
  %v274 = vpop.f32.mrb[0].mxu0
  %v275 = vadd.f32 0.0, %v274
  %v276 = vpop.f32.mrb[0].mxu0
  %v277 = vadd.f32 0.0, %v276
  %v278 = vpop.f32.mrb[0].mxu0
  %v279 = vadd.f32 0.0, %v278
  %v280 = vpop.f32.mrb[0].mxu0
  %v281 = vadd.f32 0.0, %v280
  %282 = vmatprep.mubr.bf16.mxu0 0
  %283 = vmatmul.mubr.bf16.gmra.mrb[0].mxu0 %v185
  %v284 = vpop.f32.mrb[0].mxu0
  %v285 = vadd.f32 0.0, %v284
  %v286 = vpop.f32.mrb[0].mxu0
  %v287 = vadd.f32 0.0, %v286
  %v288 = vpop.f32.mrb[0].mxu0
  %v289 = vadd.f32 0.0, %v288
  %v290 = vpop.f32.mrb[0].mxu0
  %v291 = vadd.f32 0.0, %v290
  %292 = vmatprep.mubr.bf16.mxu0 0
  %293 = vmatmul.mubr.bf16.gmra.mrb[0].mxu0 %v188
  %v294 = vpop.f32.mrb[0].mxu0
  %v295 = vadd.f32 0.0, %v294
  %v296 = vpop.f32.mrb[0].mxu0
  %v297 = vadd.f32 0.0, %v296
  %v298 = vpop.f32.mrb[0].mxu0
  %v299 = vadd.f32 0.0, %v298
  %v300 = vpop.f32.mrb[0].mxu0
  %v301 = vadd.f32 0.0, %v300
  %302 = vdwg.mxu0
  %v303 = vpack.c.bf16 %v229, %v225
  %v304 = vpack.c.bf16 %v231, %v227
  %v305 = vpack.c.bf16 %v239, %v235
  %v306 = vpack.c.bf16 %v241, %v237
  %v307 = vpack.c.bf16 %v249, %v245
  %v308 = vpack.c.bf16 %v251, %v247
  %v309 = vpack.c.bf16 %v259, %v255
  %v310 = vpack.c.bf16 %v261, %v257
  %v311 = vpack.c.bf16 %v269, %v265
  %v312 = vpack.c.bf16 %v271, %v267
  %v313 = vpack.c.bf16 %v279, %v275
  %v314 = vpack.c.bf16 %v281, %v277
  %v315 = vpack.c.bf16 %v289, %v285
  %v316 = vpack.c.bf16 %v291, %v287
  %v317 = vpack.c.bf16 %v299, %v295
  %v318 = vpack.c.bf16 %v301, %v297
  %v319 = vld [vmem:[%s3] sm:$0x3]
  %v321 = vlaneseq
  %v322 = vshrl.u32 %v321, 7
  %v323 = vsub.s32 0, %v322
  %v324 = vrot.slane %v319, %v323
  %v325 = vlaneseq
  %v326 = vshrl.u32 %v325, 7
  %v327 = vsub.s32 1, %v326
  %v328 = vrot.slane %v319, %v327
  %v331 = vpack.c.bf16 %v324, %v324
  %v332 = vpack.c.bf16 %v328, %v328
  %v334 = vpack.i.b16 %v331, %v331
  %v336 = vlaneseq
  %v337 = vshrl.u32 %v336, 7
  %v338 = vsub.s32 0, %v337
  %v339 = vrot.slane %v334, %v338
  %v341 = vpack.i.b16 %v332, %v332
  %v343 = vlaneseq
  %v344 = vshrl.u32 %v343, 7
  %v345 = vsub.s32 0, %v344
  %v346 = vrot.slane %v341, %v345
  %v347 = vadd.bf16 %v303, %v339
  %v348 = vadd.bf16 %v304, %v346
  %v349 = vadd.bf16 %v305, %v339
  %v350 = vadd.bf16 %v306, %v346
  %v351 = vadd.bf16 %v307, %v339
  %v352 = vadd.bf16 %v308, %v346
  %v353 = vadd.bf16 %v309, %v339
  %v354 = vadd.bf16 %v310, %v346
  %v355 = vadd.bf16 %v311, %v339
  %v356 = vadd.bf16 %v312, %v346
  %v357 = vadd.bf16 %v313, %v339
  %v358 = vadd.bf16 %v314, %v346
  %v359 = vadd.bf16 %v315, %v339
  %v360 = vadd.bf16 %v316, %v346
  %v361 = vadd.bf16 %v317, %v339
  %v362 = vadd.bf16 %v318, %v346
  %v363 = vmax.bf16 %v347, 0
  %v364 = vmax.bf16 %v348, 0
  %v365 = vmax.bf16 %v349, 0
  %v366 = vmax.bf16 %v350, 0
  %v367 = vmax.bf16 %v351, 0
  %v368 = vmax.bf16 %v352, 0
  %v369 = vmax.bf16 %v353, 0
  %v370 = vmax.bf16 %v354, 0
  %v371 = vmax.bf16 %v355, 0
  %v372 = vmax.bf16 %v356, 0
  %v373 = vmax.bf16 %v357, 0
  %v374 = vmax.bf16 %v358, 0
  %v375 = vmax.bf16 %v359, 0
  %v376 = vmax.bf16 %v360, 0
  %v377 = vmax.bf16 %v361, 0
  %v378 = vmax.bf16 %v362, 0
  %v379 = vld [vmem:[%s4] sm:$0xf]
  %v380 = vld [vmem:[%s4 + $0x4] sm:$0xf]
  %v381 = vld [vmem:[%s4 + $0x8] sm:$0xf]
  %v382 = vld [vmem:[%s4 + $0xc] sm:$0xf]
  %v383 = vld [vmem:[%s4 + $0x10] sm:$0xf]
  %v384 = vld [vmem:[%s4 + $0x14] sm:$0xf]
  %v385 = vld [vmem:[%s4 + $0x18] sm:$0xf]
  %v386 = vld [vmem:[%s4 + $0x1c] sm:$0xf]
  %v387 = vld [vmem:[%s4 + $0x20] sm:$0xf]
  %v388 = vld [vmem:[%s4 + $0x24] sm:$0xf]
  %v389 = vld [vmem:[%s4 + $0x28] sm:$0xf]
  %v390 = vld [vmem:[%s4 + $0x2c] sm:$0xf]
  %v391 = vld [vmem:[%s4 + $0x30] sm:$0xf]
  %v392 = vld [vmem:[%s4 + $0x34] sm:$0xf]
  %v393 = vld [vmem:[%s4 + $0x38] sm:$0xf]
  %v394 = vld [vmem:[%s4 + $0x3c] sm:$0xf]
  %v395 = vld [vmem:[%s4 + $0x40] sm:$0xf]
  %v396 = vld [vmem:[%s4 + $0x44] sm:$0xf]
  %v397 = vld [vmem:[%s4 + $0x48] sm:$0xf]
  %v398 = vld [vmem:[%s4 + $0x4c] sm:$0xf]
  %v399 = vld [vmem:[%s4 + $0x50] sm:$0xf]
  %v400 = vld [vmem:[%s4 + $0x54] sm:$0xf]
  %v401 = vld [vmem:[%s4 + $0x58] sm:$0xf]
  %v402 = vld [vmem:[%s4 + $0x5c] sm:$0xf]
  %v403 = vld [vmem:[%s4 + $0x60] sm:$0xf]
  %v404 = vld [vmem:[%s4 + $0x64] sm:$0xf]
  %v405 = vld [vmem:[%s4 + $0x68] sm:$0xf]
  %v406 = vld [vmem:[%s4 + $0x6c] sm:$0xf]
  %v407 = vld [vmem:[%s4 + $0x70] sm:$0xf]
  %v408 = vld [vmem:[%s4 + $0x74] sm:$0xf]
  %v409 = vld [vmem:[%s4 + $0x78] sm:$0xf]
  %v410 = vld [vmem:[%s4 + $0x7c] sm:$0xf]
  %v443 = vunpack.c.l.b16 %v379
  %v444 = vunpack.c.l.b16 %v380
  %v445 = vunpack.c.l.b16 %v381
  %v446 = vunpack.c.l.b16 %v382
  %v447 = vunpack.c.l.b16 %v383
  %v448 = vunpack.c.l.b16 %v384
  %v449 = vunpack.c.l.b16 %v385
  %v450 = vunpack.c.l.b16 %v386
  %v451 = vunpack.c.l.b16 %v387
  %v452 = vunpack.c.l.b16 %v388
  %v453 = vunpack.c.l.b16 %v389
  %v454 = vunpack.c.l.b16 %v390
  %v455 = vunpack.c.l.b16 %v391
  %v456 = vunpack.c.l.b16 %v392
  %v457 = vunpack.c.l.b16 %v393
  %v458 = vunpack.c.l.b16 %v394
  %v459 = vunpack.c.l.b16 %v395
  %v460 = vunpack.c.l.b16 %v396
  %v461 = vunpack.c.l.b16 %v397
  %v462 = vunpack.c.l.b16 %v398
  %v463 = vunpack.c.l.b16 %v399
  %v464 = vunpack.c.l.b16 %v400
  %v465 = vunpack.c.l.b16 %v401
  %v466 = vunpack.c.l.b16 %v402
  %v467 = vunpack.c.l.b16 %v403
  %v468 = vunpack.c.l.b16 %v404
  %v469 = vunpack.c.l.b16 %v405
  %v470 = vunpack.c.l.b16 %v406
  %v471 = vunpack.c.l.b16 %v407
  %v472 = vunpack.c.l.b16 %v408
  %v473 = vunpack.c.l.b16 %v409
  %v474 = vunpack.c.l.b16 %v410
  %v475 = vpack.c.b16 %v444, %v443
  %v476 = vpack.c.b16 %v446, %v445
  %v477 = vpack.c.b16 %v448, %v447
  %v478 = vpack.c.b16 %v450, %v449
  %v479 = vpack.c.b16 %v452, %v451
  %v480 = vpack.c.b16 %v454, %v453
  %v481 = vpack.c.b16 %v456, %v455
  %v482 = vpack.c.b16 %v458, %v457
  %v483 = vpack.c.b16 %v460, %v459
  %v484 = vpack.c.b16 %v462, %v461
  %v485 = vpack.c.b16 %v464, %v463
  %v486 = vpack.c.b16 %v466, %v465
  %v487 = vpack.c.b16 %v468, %v467
  %v488 = vpack.c.b16 %v470, %v469
  %v489 = vpack.c.b16 %v472, %v471
  %v490 = vpack.c.b16 %v474, %v473
  %507 = vmatprep.subr.bf16.mxu0 0
  %508 = vmatpush1.bf16.msra.mxu0 %v475
  %509 = vmatprep.subr.bf16.mxu0 0
  %510 = vmatpush1.bf16.msra.mxu0 %v476
  %511 = vmatprep.subr.bf16.mxu0 0
  %512 = vmatpush1.bf16.msra.mxu0 %v477
  %513 = vmatprep.subr.bf16.mxu0 0
  %514 = vmatpush1.bf16.msra.mxu0 %v478
  %515 = vmatprep.subr.bf16.mxu0 0
  %516 = vmatpush1.bf16.msra.mxu0 %v479
  %517 = vmatprep.subr.bf16.mxu0 0
  %518 = vmatpush1.bf16.msra.mxu0 %v480
  %519 = vmatprep.subr.bf16.mxu0 0
  %520 = vmatpush1.bf16.msra.mxu0 %v481
  %521 = vmatprep.subr.bf16.mxu0 0
  %522 = vmatpush1.bf16.msra.mxu0 %v482
  %523 = vmatprep.subr.bf16.mxu0 0
  %524 = vmatpush1.bf16.msra.mxu0 %v483
  %525 = vmatprep.subr.bf16.mxu0 0
  %526 = vmatpush1.bf16.msra.mxu0 %v484
  %527 = vmatprep.subr.bf16.mxu0 0
  %528 = vmatpush1.bf16.msra.mxu0 %v485
  %529 = vmatprep.subr.bf16.mxu0 0
  %530 = vmatpush1.bf16.msra.mxu0 %v486
  %531 = vmatprep.subr.bf16.mxu0 0
  %532 = vmatpush1.bf16.msra.mxu0 %v487
  %533 = vmatprep.subr.bf16.mxu0 0
  %534 = vmatpush1.bf16.msra.mxu0 %v488
  %535 = vmatprep.subr.bf16.mxu0 0
  %536 = vmatpush1.bf16.msra.mxu0 %v489
  %537 = vmatprep.subr.bf16.mxu0 0
  %538 = vmatpush1.bf16.msra.mxu0 %v490
  %539 = vmatprep.mubr.bf16.mxu0 %v364
  %540 = vmatmul.mubr.bf16.gmra.mrb[0].mxu0 %v363
  %v541 = vpop.f32.mrb[0].mxu0
  %v542 = vadd.f32 0.0, %v541
  %v543 = vpop.f32.mrb[0].mxu0
  %v544 = vpop.f32.mrb[0].mxu0
  %v545 = vadd.f32 0.0, %v544
  %v546 = vpop.f32.mrb[0].mxu0
  %547 = vmatprep.mubr.bf16.mxu0 %v366
  %548 = vmatmul.mubr.bf16.gmra.mrb[0].mxu0 %v365
  %v549 = vpop.f32.mrb[0].mxu0
  %v550 = vadd.f32 0.0, %v549
  %v551 = vpop.f32.mrb[0].mxu0
  %v552 = vpop.f32.mrb[0].mxu0
  %v553 = vadd.f32 0.0, %v552
  %v554 = vpop.f32.mrb[0].mxu0
  %555 = vmatprep.mubr.bf16.mxu0 %v368
  %556 = vmatmul.mubr.bf16.gmra.mrb[0].mxu0 %v367
  %v557 = vpop.f32.mrb[0].mxu0
  %v558 = vadd.f32 0.0, %v557
  %v559 = vpop.f32.mrb[0].mxu0
  %v560 = vpop.f32.mrb[0].mxu0
  %v561 = vadd.f32 0.0, %v560
  %v562 = vpop.f32.mrb[0].mxu0
  %563 = vmatprep.mubr.bf16.mxu0 %v370
  %564 = vmatmul.mubr.bf16.gmra.mrb[0].mxu0 %v369
  %v565 = vpop.f32.mrb[0].mxu0
  %v566 = vadd.f32 0.0, %v565
  %v567 = vpop.f32.mrb[0].mxu0
  %v568 = vpop.f32.mrb[0].mxu0
  %v569 = vadd.f32 0.0, %v568
  %v570 = vpop.f32.mrb[0].mxu0
  %571 = vmatprep.mubr.bf16.mxu0 %v372
  %572 = vmatmul.mubr.bf16.gmra.mrb[0].mxu0 %v371
  %v573 = vpop.f32.mrb[0].mxu0
  %v574 = vadd.f32 0.0, %v573
  %v575 = vpop.f32.mrb[0].mxu0
  %v576 = vpop.f32.mrb[0].mxu0
  %v577 = vadd.f32 0.0, %v576
  %v578 = vpop.f32.mrb[0].mxu0
  %579 = vmatprep.mubr.bf16.mxu0 %v374
  %580 = vmatmul.mubr.bf16.gmra.mrb[0].mxu0 %v373
  %v581 = vpop.f32.mrb[0].mxu0
  %v582 = vadd.f32 0.0, %v581
  %v583 = vpop.f32.mrb[0].mxu0
  %v584 = vpop.f32.mrb[0].mxu0
  %v585 = vadd.f32 0.0, %v584
  %v586 = vpop.f32.mrb[0].mxu0
  %587 = vmatprep.mubr.bf16.mxu0 %v376
  %588 = vmatmul.mubr.bf16.gmra.mrb[0].mxu0 %v375
  %v589 = vpop.f32.mrb[0].mxu0
  %v590 = vadd.f32 0.0, %v589
  %v591 = vpop.f32.mrb[0].mxu0
  %v592 = vpop.f32.mrb[0].mxu0
  %v593 = vadd.f32 0.0, %v592
  %v594 = vpop.f32.mrb[0].mxu0
  %595 = vmatprep.mubr.bf16.mxu0 %v378
  %596 = vmatmul.mubr.bf16.gmra.mrb[0].mxu0 %v377
  %v597 = vpop.f32.mrb[0].mxu0
  %v598 = vadd.f32 0.0, %v597
  %v599 = vpop.f32.mrb[0].mxu0
  %v600 = vpop.f32.mrb[0].mxu0
  %v601 = vadd.f32 0.0, %v600
  %v602 = vpop.f32.mrb[0].mxu0
  %603 = vdwg.mxu0
  %v604 = vpack.c.bf16 %v545, %v542
  %v605 = vpack.c.bf16 %v553, %v550
  %v606 = vpack.c.bf16 %v561, %v558
  %v607 = vpack.c.bf16 %v569, %v566
  %v608 = vpack.c.bf16 %v577, %v574
  %v609 = vpack.c.bf16 %v585, %v582
  %v610 = vpack.c.bf16 %v593, %v590
  %v611 = vpack.c.bf16 %v601, %v598
  %v612 = vld [vmem:[%s5] sm:$0x1]
  %v613 = vpack.c.bf16 %v612, %v612
  %v615 = vpack.i.b16 %v613, %v613
  %v617 = vlaneseq
  %v618 = vshrl.u32 %v617, 7
  %v619 = vsub.s32 0, %v618
  %v620 = vrot.slane %v615, %v619
  %v621 = vadd.bf16 %v604, %v620
  %v622 = vadd.bf16 %v605, %v620
  %v623 = vadd.bf16 %v606, %v620
  %v624 = vadd.bf16 %v607, %v620
  %v625 = vadd.bf16 %v608, %v620
  %v626 = vadd.bf16 %v609, %v620
  %v627 = vadd.bf16 %v610, %v620
  %v628 = vadd.bf16 %v611, %v620
  %v629 = vmax.bf16 %v621, 0
  %v630 = vmax.bf16 %v622, 0
  %v631 = vmax.bf16 %v623, 0
  %v632 = vmax.bf16 %v624, 0
  %v633 = vmax.bf16 %v625, 0
  %v634 = vmax.bf16 %v626, 0
  %v635 = vmax.bf16 %v627, 0
  %v636 = vmax.bf16 %v628, 0
  %v637 = vunpack.c.l.bf16 %v629
  %v638 = vunpack.c.h.bf16 %v629
  %v639 = vunpack.c.l.bf16 %v630
  %v640 = vunpack.c.h.bf16 %v630
  %v641 = vunpack.c.l.bf16 %v631
  %v642 = vunpack.c.h.bf16 %v631
  %v643 = vunpack.c.l.bf16 %v632
  %v644 = vunpack.c.h.bf16 %v632
  %v645 = vunpack.c.l.bf16 %v633
  %v646 = vunpack.c.h.bf16 %v633
  %v647 = vunpack.c.l.bf16 %v634
  %v648 = vunpack.c.h.bf16 %v634
  %v649 = vunpack.c.l.bf16 %v635
  %v650 = vunpack.c.h.bf16 %v635
  %v651 = vunpack.c.l.bf16 %v636
  %v652 = vunpack.c.h.bf16 %v636
  %v653 = vld [vmem:[%s6] sm:$0x1]
  %v654 = vunpack.c.l.bf16 %v653
  %v655 = vlaneseq
  %v656 = vshrl.u32 %v655, 7
  %v657 = vsub.s32 0, %v656
  %v658 = vrot.slane %v654, %v657
  %v659 = vmul.f32 %v637, %v658
  %v660 = vmul.f32 %v638, %v658
  %v661 = vmul.f32 %v639, %v658
  %v662 = vmul.f32 %v640, %v658
  %v663 = vmul.f32 %v641, %v658
  %v664 = vmul.f32 %v642, %v658
  %v665 = vmul.f32 %v643, %v658
  %v666 = vmul.f32 %v644, %v658
  %v667 = vmul.f32 %v645, %v658
  %v668 = vmul.f32 %v646, %v658
  %v669 = vmul.f32 %v647, %v658
  %v670 = vmul.f32 %v648, %v658
  %v671 = vmul.f32 %v649, %v658
  %v672 = vmul.f32 %v650, %v658
  %v673 = vmul.f32 %v651, %v658
  %v674 = vmul.f32 %v652, %v658
  %675 = vadd.xlane.f32.xlu0 %v659
  %v676 = vpop.xlane.xlu0 %675
  %677 = vadd.xlane.f32.xlu0 %v660
  %v678 = vpop.xlane.xlu0 %677
  %679 = vadd.xlane.f32.xlu0 %v661
  %v680 = vpop.xlane.xlu0 %679
  %681 = vadd.xlane.f32.xlu0 %v662
  %v682 = vpop.xlane.xlu0 %681
  %683 = vadd.xlane.f32.xlu0 %v663
  %v684 = vpop.xlane.xlu0 %683
  %685 = vadd.xlane.f32.xlu0 %v664
  %v686 = vpop.xlane.xlu0 %685
  %687 = vadd.xlane.f32.xlu0 %v665
  %v688 = vpop.xlane.xlu0 %687
  %689 = vadd.xlane.f32.xlu0 %v666
  %v690 = vpop.xlane.xlu0 %689
  %691 = vadd.xlane.f32.xlu0 %v667
  %v692 = vpop.xlane.xlu0 %691
  %693 = vadd.xlane.f32.xlu0 %v668
  %v694 = vpop.xlane.xlu0 %693
  %695 = vadd.xlane.f32.xlu0 %v669
  %v696 = vpop.xlane.xlu0 %695
  %697 = vadd.xlane.f32.xlu0 %v670
  %v698 = vpop.xlane.xlu0 %697
  %699 = vadd.xlane.f32.xlu0 %v671
  %v700 = vpop.xlane.xlu0 %699
  %701 = vadd.xlane.f32.xlu0 %v672
  %v702 = vpop.xlane.xlu0 %701
  %703 = vadd.xlane.f32.xlu0 %v673
  %v704 = vpop.xlane.xlu0 %703
  %705 = vadd.xlane.f32.xlu0 %v674
  %v706 = vpop.xlane.xlu0 %705
  %v707 = vld [vmem:[#allocation2] sm:$0x1]
  %709 = vset.pattern.permute.xlu0 0
  %710 = vperm.xlu0 %709, %v707
  %v711 = vpop.permute.xlu0 %710
  %v713 = vlaneseq
  %v714 = vshrl.u32 %v713, 7
  %v715 = vsub.s32 0, %v714
  %v716 = vrot.slane %v711, %v715
  %v717 = vadd.f32 %v676, %v716
  %v718 = vadd.f32 %v678, %v716
  %v719 = vadd.f32 %v680, %v716
  %v720 = vadd.f32 %v682, %v716
  %v721 = vadd.f32 %v684, %v716
  %v722 = vadd.f32 %v686, %v716
  %v723 = vadd.f32 %v688, %v716
  %v724 = vadd.f32 %v690, %v716
  %v725 = vadd.f32 %v692, %v716
  %v726 = vadd.f32 %v694, %v716
  %v727 = vadd.f32 %v696, %v716
  %v728 = vadd.f32 %v698, %v716
  %v729 = vadd.f32 %v700, %v716
  %v730 = vadd.f32 %v702, %v716
  %v731 = vadd.f32 %v704, %v716
  %v732 = vadd.f32 %v706, %v716
  %v749 = vlaneseq
  %v750 = vand.u32 %v749, 127
  %v751 = vlaneseq
  %v752 = vshrl.u32 %v751, 7
  %v753 = vsub.s32 %v750, %v752
  %v754 = vrot.slane %v717, %v753
  %v755 = vadd.s32 %v750, 4294967288
  %v756 = vlaneseq
  %v757 = vshrl.u32 %v756, 7
  %v758 = vsub.s32 %v755, %v757
  %v759 = vrot.slane %v718, %v758
  %vm760 = vcmask 130112
  %v761 = vsel %vm760, %v759, %v754
  %v762 = vadd.s32 %v750, 4294967280
  %v763 = vlaneseq
  %v764 = vshrl.u32 %v763, 7
  %v765 = vsub.s32 %v762, %v764
  %v766 = vrot.slane %v719, %v765
  %vm767 = vcmask 195712
  %v768 = vsel %vm767, %v766, %v761
  %v769 = vadd.s32 %v750, 4294967272
  %v770 = vlaneseq
  %v771 = vshrl.u32 %v770, 7
  %v772 = vsub.s32 %v769, %v771
  %v773 = vrot.slane %v720, %v772
  %vm774 = vcmask 261312
  %v775 = vsel %vm774, %v773, %v768
  %v776 = vadd.s32 %v750, 4294967264
  %v777 = vlaneseq
  %v778 = vshrl.u32 %v777, 7
  %v779 = vsub.s32 %v776, %v778
  %v780 = vrot.slane %v721, %v779
  %vm781 = vcmask 326912
  %v782 = vsel %vm781, %v780, %v775
  %v783 = vadd.s32 %v750, 4294967256
  %v784 = vlaneseq
  %v785 = vshrl.u32 %v784, 7
  %v786 = vsub.s32 %v783, %v785
  %v787 = vrot.slane %v722, %v786
  %vm788 = vcmask 392512
  %v789 = vsel %vm788, %v787, %v782
  %v790 = vadd.s32 %v750, 4294967248
  %v791 = vlaneseq
  %v792 = vshrl.u32 %v791, 7
  %v793 = vsub.s32 %v790, %v792
  %v794 = vrot.slane %v723, %v793
  %vm795 = vcmask 458112
  %v796 = vsel %vm795, %v794, %v789
  %v797 = vadd.s32 %v750, 4294967240
  %v798 = vlaneseq
  %v799 = vshrl.u32 %v798, 7
  %v800 = vsub.s32 %v797, %v799
  %v801 = vrot.slane %v724, %v800
  %vm802 = vcmask 523712
  %v803 = vsel %vm802, %v801, %v796
  %v804 = vadd.s32 %v750, 4294967232
  %v805 = vlaneseq
  %v806 = vshrl.u32 %v805, 7
  %v807 = vsub.s32 %v804, %v806
  %v808 = vrot.slane %v725, %v807
  %vm809 = vcmask 589312
  %v810 = vsel %vm809, %v808, %v803
  %v811 = vadd.s32 %v750, 4294967224
  %v812 = vlaneseq
  %v813 = vshrl.u32 %v812, 7
  %v814 = vsub.s32 %v811, %v813
  %v815 = vrot.slane %v726, %v814
  %vm816 = vcmask 654912
  %v817 = vsel %vm816, %v815, %v810
  %v818 = vadd.s32 %v750, 4294967216
  %v819 = vlaneseq
  %v820 = vshrl.u32 %v819, 7
  %v821 = vsub.s32 %v818, %v820
  %v822 = vrot.slane %v727, %v821
  %vm823 = vcmask 720512
  %v824 = vsel %vm823, %v822, %v817
  %v825 = vadd.s32 %v750, 4294967208
  %v826 = vlaneseq
  %v827 = vshrl.u32 %v826, 7
  %v828 = vsub.s32 %v825, %v827
  %v829 = vrot.slane %v728, %v828
  %vm830 = vcmask 786112
  %v831 = vsel %vm830, %v829, %v824
  %v832 = vadd.s32 %v750, 4294967200
  %v833 = vlaneseq
  %v834 = vshrl.u32 %v833, 7
  %v835 = vsub.s32 %v832, %v834
  %v836 = vrot.slane %v729, %v835
  %vm837 = vcmask 851712
  %v838 = vsel %vm837, %v836, %v831
  %v839 = vadd.s32 %v750, 4294967192
  %v840 = vlaneseq
  %v841 = vshrl.u32 %v840, 7
  %v842 = vsub.s32 %v839, %v841
  %v843 = vrot.slane %v730, %v842
  %vm844 = vcmask 917312
  %v845 = vsel %vm844, %v843, %v838
  %v846 = vadd.s32 %v750, 4294967184
  %v847 = vlaneseq
  %v848 = vshrl.u32 %v847, 7
  %v849 = vsub.s32 %v846, %v848
  %v850 = vrot.slane %v731, %v849
  %vm851 = vcmask 982912
  %v852 = vsel %vm851, %v850, %v845
  %v853 = vadd.s32 %v750, 4294967176
  %v854 = vlaneseq
  %v855 = vshrl.u32 %v854, 7
  %v856 = vsub.s32 %v853, %v855
  %v857 = vrot.slane %v732, %v856
  %vm858 = vcmask 1048512
  %v859 = vsel %vm858, %v857, %v852
  %861 = vst [vmem:[%s8] sm:$0x1] %v859
  // Predicated region
  $region34: #{critic_forward.1} parent=0 // pred_check
    _
  $region35: #{critic_forward.1} parent=0 // pred_check_branch
    %863 = sbr.rel (0) target = $region37
  $region36: #{critic_forward.1} parent=0 // pred_region
    _
  $region37: #{critic_forward.1} parent=0 // pred_fallthru
    _
  // Predicated region
  $region38: #{critic_forward.1} parent=0 // pred_check
    _
  $region39: #{critic_forward.1} parent=0 // pred_check_branch
    %865 = sbr.rel (0) target = $region41
  $region40: #{critic_forward.1} parent=0 // pred_region
    _
  $region41: #{critic_forward.1} parent=0 // pred_fallthru
    _

</llo_original>
